<compile_context>
chip_gen: v5e
topology: v5e:2x2
jax: 0.10.0
libtpu: 0.0.40
codegen_flags: <defaults>
</compile_context>

<pallas_src>
import jax
import jax.numpy as jnp
from jax import lax
from jax.experimental import pallas as pl
from jax.experimental.pallas import tpu as pltpu


def _multifield_kernel(s1_ref, s2_ref, wsel_ref, expand_ref, b_ref, o_ref):
    s1 = s1_ref[...]           # (TB, Np)  f32, lane-dense packed rows
    s2 = s2_ref[...]           # (TB, Np)
    w_sel = wsel_ref[...]      # (Np, pack) block-diagonal weight selector
    expand = expand_ref[...]   # (pack, Np) 0/1 segment expander
    b = b_ref[0, 0]            # scalar bias from SMEM

    # Linear(n_bins, 1) + Tanh for every packed logical row -> (TB, pack)
    att1 = jnp.tanh(
        jnp.dot(s1, w_sel, precision=lax.Precision.HIGHEST,
                preferred_element_type=jnp.float32) + b)
    att2 = jnp.tanh(
        jnp.dot(s2, w_sel, precision=lax.Precision.HIGHEST,
                preferred_element_type=jnp.float32) + b)

    # softmax([att1, att2]) == [sigmoid(att1-att2), 1 - sigmoid(att1-att2)]
    # (exact identity; att1-att2 is bounded in [-2, 2], numerically safe)
    d = att1 - att2
    a1 = 1.0 / (1.0 + jnp.exp(-d))                           # (TB, pack)

    # broadcast each attention scalar back over its N_sub-lane segment
    a1e = jnp.dot(a1, expand, precision=lax.Precision.HIGHEST,
                  preferred_element_type=jnp.float32)        # (TB, Np)

    # s1*a1 + s2*a2  with a2 = 1 - a1
    o_ref[...] = s2 + (s1 - s2) * a1e


def _round_up(x, m):
    return ((x + m - 1) // m) * m


def _next_pow2(x):
    p = 1
    while p < x:
        p <<= 1
    return p


def multifield_forward(sim_vec1, sim_vec2, weight, bias, *, block_rows=1024):
    """sim_vec{1,2}: (..., n_bins); weight: (n_bins,); bias: scalar / (1,).

    block_rows = packed rows per grid step; 1024 keeps double-buffered VMEM
    usage ~3 MiB, safe on v5e (16 MiB scoped default) through v7x (64 MiB).
    """
    squeeze = sim_vec1.ndim == 1
    if squeeze:
        sim_vec1 = sim_vec1[None, :]
        sim_vec2 = sim_vec2[None, :]

    orig_shape = sim_vec1.shape
    N = orig_shape[-1]
    out_dtype = sim_vec1.dtype
    f32 = jnp.float32

    # flatten any leading dims; cast once in the wrapper
    s1 = sim_vec1.reshape(-1, N).astype(f32)
    s2 = sim_vec2.reshape(-1, N).astype(f32)
    B = s1.shape[0]
    w = weight.astype(f32).reshape(N)
    b2d = bias.astype(f32).reshape(1, 1)

    # ---- lane packing: pad n_bins to N_sub (divides 128 or multiple of 128),
    # then pack `pack` logical rows per 128-lane physical row ----------------
    LANES = 128
    if N <= LANES:
        N_sub = _next_pow2(N)              # divides 128
        pack = LANES // N_sub
    else:
        N_sub = _round_up(N, LANES)        # lane-dense even for n_bins > 128
        pack = 1
    Np = N_sub * pack                      # physical lane width (multiple of 128)

    if N_sub != N:
        # zero-pad bins; padded lanes get zero weight -> no effect on att
        s1 = jnp.pad(s1, ((0, 0), (0, N_sub - N)))
        s2 = jnp.pad(s2, ((0, 0), (0, N_sub - N)))
        w = jnp.pad(w, (0, N_sub - N))

    # ---- batch tiling --------------------------------------------------------
    R = -(-B // pack)                          # packed rows needed
    TB = min(block_rows, _round_up(R, 8))      # packed rows per grid step
    R_pad = _round_up(R, TB)
    B_pad = R_pad * pack

    if B_pad != B:
        zpad = ((0, B_pad - B), (0, 0))
        s1 = jnp.pad(s1, zpad)
        s2 = jnp.pad(s2, zpad)
    s1p = s1.reshape(R_pad, Np)                # row-major: pack rows per 128 lanes
    s2p = s2.reshape(R_pad, Np)

    # block-diagonal selector folding the Linear weight (per-segment dot) and
    # a 0/1 expander broadcasting each attention scalar over its segment
    seg = jnp.repeat(jnp.eye(pack, dtype=f32), N_sub, axis=0)  # (Np, pack)
    w_sel = seg * jnp.tile(w, pack)[:, None]                   # (Np, pack)
    expand = seg.T                                             # (pack, Np)

    grid = (R_pad // TB,)
    out = pl.pallas_call(
        _multifield_kernel,
        out_shape=jax.ShapeDtypeStruct((R_pad, Np), f32),
        grid=grid,
        in_specs=[
            pl.BlockSpec((TB, Np), lambda i: (i, 0)),
            pl.BlockSpec((TB, Np), lambda i: (i, 0)),
            pl.BlockSpec((Np, pack), lambda i: (0, 0)),    # resident across grid
            pl.BlockSpec((pack, Np), lambda i: (0, 0)),    # resident across grid
            pl.BlockSpec(memory_space=pltpu.MemorySpace.SMEM),  # scalar bias
        ],
        out_specs=pl.BlockSpec((TB, Np), lambda i: (i, 0)),
        compiler_params=pltpu.CompilerParams(
            dimension_semantics=("parallel",)),   # no carry -> megacore on v7x
    )(s1p, s2p, w_sel, expand, b2d)

    out = out.reshape(B_pad, N_sub)[:B, :N].astype(out_dtype)
    out = out.reshape(orig_shape)
    return out[0] if squeeze else out


def _reference(sim_vec1, sim_vec2, weight, bias):
    att1 = jnp.tanh(jnp.sum(sim_vec1 * weight, axis=-1, keepdims=True) + bias)
    att2 = jnp.tanh(jnp.sum(sim_vec2 * weight, axis=-1, keepdims=True) + bias)
    att = jnp.concatenate([att1, att2], axis=-1)
    sm = jax.nn.softmax(att, axis=-1)
    return sim_vec1 * sm[..., 0:1] + sim_vec2 * sm[..., 1:2]


if __name__ == "__main__":
    # configs['feature_len'] (n_bins) chosen as 32 for this synthetic run.
    n_bins = 32
    batch = 8

    key = jax.random.PRNGKey(0)
    k1, k2, kw, kb = jax.random.split(key, 4)

    sim_vec1 = jax.random.normal(k1, (batch, n_bins), dtype=jnp.float32)
    sim_vec2 = jax.random.normal(k2, (batch, n_bins), dtype=jnp.float32)

    # Deterministic init mimicking nn.Linear: U(-1/sqrt(n_bins), 1/sqrt(n_bins))
    bound = 1.0 / jnp.sqrt(jnp.float32(n_bins))
    weight = jax.random.uniform(kw, (n_bins,), jnp.float32, -bound, bound)
    bias = jax.random.uniform(kb, (), jnp.float32, -bound, bound)

    out = multifield_forward(sim_vec1, sim_vec2, weight, bias)
    out = jax.block_until_ready(out)

    ref = _reference(sim_vec1, sim_vec2, weight, bias)
    assert out.shape == (batch, n_bins)
    assert jnp.allclose(out, ref, atol=1e-5, rtol=1e-5), "mismatch vs reference"

    # also exercise the 1-D input path of the original module
    out1d = jax.block_until_ready(
        multifield_forward(sim_vec1[0], sim_vec2[0], weight, bias))
    assert out1d.shape == (n_bins,)
    assert jnp.allclose(out1d, ref[0], atol=1e-5, rtol=1e-5), "1-D path mismatch"

    # non-power-of-two n_bins path (lane padding branch)
    nb2 = 20
    sv1 = jax.random.normal(k1, (5, nb2), dtype=jnp.float32)
    sv2 = jax.random.normal(k2, (5, nb2), dtype=jnp.float32)
    w2 = jax.random.uniform(kw, (nb2,), jnp.float32, -bound, bound)
    out2 = jax.block_until_ready(multifield_forward(sv1, sv2, w2, bias))
    ref2 = _reference(sv1, sv2, w2, bias)
    assert jnp.allclose(out2, ref2, atol=1e-5, rtol=1e-5), "padded-bins mismatch"

    print("KERNEL_OK")
</pallas_src>

<mosaic_0001>
module attributes {stable_mosaic.version = 11 : i64} {
  func.func @_multifield_kernel(%arg0: i32, %arg1: memref<8x128xf32, #tpu.memory_space<vmem>>, %arg2: memref<8x128xf32, #tpu.memory_space<vmem>>, %arg3: memref<128x4xf32, #tpu.memory_space<vmem>>, %arg4: memref<4x128xf32, #tpu.memory_space<vmem>>, %arg5: memref<1x1xf32, #tpu.memory_space<smem>>, %arg6: memref<8x128xf32, #tpu.memory_space<vmem>>) attributes {dimension_semantics = [#tpu.dimension_semantics<parallel>], iteration_bounds = array<i64: 1>, scalar_prefetch = 0 : i64, scratch_operands = 0 : i64, tpu.core_type = #tpu.core_type<tc>, window_params = [{transform_indices = @transform_0, window_bounds = array<i64: 8, 128>}, {transform_indices = @transform_1, window_bounds = array<i64: 8, 128>}, {pipeline_mode = #tpu.pipeline_mode<synchronous>, transform_indices = @transform_2, window_bounds = array<i64: 128, 4>}, {pipeline_mode = #tpu.pipeline_mode<synchronous>, transform_indices = @transform_3, window_bounds = array<i64: 4, 128>}, {transform_indices = @transform_4, window_bounds = array<i64: 1, 1>}, {transform_indices = @transform_5, window_bounds = array<i64: 8, 128>}]} {
    %c0 = arith.constant 0 : index
    %c0_0 = arith.constant 0 : index
    %0 = vector.load %arg1[%c0, %c0_0] : memref<8x128xf32, #tpu.memory_space<vmem>>, vector<8x128xf32>
    %c0_1 = arith.constant 0 : index
    %c0_2 = arith.constant 0 : index
    %1 = vector.load %arg2[%c0_1, %c0_2] : memref<8x128xf32, #tpu.memory_space<vmem>>, vector<8x128xf32>
    %c0_3 = arith.constant 0 : index
    %c0_4 = arith.constant 0 : index
    %2 = vector.load %arg3[%c0_3, %c0_4] : memref<128x4xf32, #tpu.memory_space<vmem>>, vector<128x4xf32>
    %c0_5 = arith.constant 0 : index
    %c0_6 = arith.constant 0 : index
    %3 = vector.load %arg4[%c0_5, %c0_6] : memref<4x128xf32, #tpu.memory_space<vmem>>, vector<4x128xf32>
    %c0_7 = arith.constant 0 : index
    %c0_8 = arith.constant 0 : index
    %4 = memref.load %arg5[%c0_7, %c0_8] : memref<1x1xf32, #tpu.memory_space<smem>>
    %cst = arith.constant dense<0.000000e+00> : vector<8x4xf32>
    %5 = tpu.matmul %0, %2, %cst {dimension_numbers = #tpu.dot_dimension_numbers<[1], [0], [0], [1], [0, 0, 1, 1], [], []>, precision = #tpu.contract_precision<fp32>} : vector<8x128xf32>, vector<128x4xf32>, vector<8x4xf32> -> vector<8x4xf32>
    %6 = vector.broadcast %4 : f32 to vector<8x4xf32>
    %7 = arith.addf %5, %6 : vector<8x4xf32>
    %8 = math.tanh %7 : vector<8x4xf32>
    %cst_9 = arith.constant dense<0.000000e+00> : vector<8x4xf32>
    %9 = tpu.matmul %1, %2, %cst_9 {dimension_numbers = #tpu.dot_dimension_numbers<[1], [0], [0], [1], [0, 0, 1, 1], [], []>, precision = #tpu.contract_precision<fp32>} : vector<8x128xf32>, vector<128x4xf32>, vector<8x4xf32> -> vector<8x4xf32>
    %10 = vector.broadcast %4 : f32 to vector<8x4xf32>
    %11 = arith.addf %9, %10 : vector<8x4xf32>
    %12 = math.tanh %11 : vector<8x4xf32>
    %13 = arith.subf %8, %12 : vector<8x4xf32>
    %cst_10 = arith.constant 0.000000e+00 : f32
    %14 = vector.broadcast %cst_10 : f32 to vector<8x4xf32>
    %15 = arith.subf %14, %13 : vector<8x4xf32>
    %16 = math.exp %15 : vector<8x4xf32>
    %cst_11 = arith.constant 1.000000e+00 : f32
    %17 = vector.broadcast %cst_11 : f32 to vector<8x4xf32>
    %18 = arith.addf %17, %16 : vector<8x4xf32>
    %cst_12 = arith.constant 1.000000e+00 : f32
    %19 = vector.broadcast %cst_12 : f32 to vector<8x4xf32>
    %20 = arith.divf %19, %18 : vector<8x4xf32>
    %cst_13 = arith.constant dense<0.000000e+00> : vector<8x128xf32>
    %21 = tpu.matmul %20, %3, %cst_13 {dimension_numbers = #tpu.dot_dimension_numbers<[1], [0], [0], [1], [0, 0, 1, 1], [], []>, precision = #tpu.contract_precision<fp32>} : vector<8x4xf32>, vector<4x128xf32>, vector<8x128xf32> -> vector<8x128xf32>
    %22 = arith.subf %0, %1 : vector<8x128xf32>
    %23 = arith.mulf %22, %21 : vector<8x128xf32>
    %24 = arith.addf %1, %23 : vector<8x128xf32>
    %c0_14 = arith.constant 0 : index
    %c0_15 = arith.constant 0 : index
    %25 = vector.load %arg6[%c0_14, %c0_15] : memref<8x128xf32, #tpu.memory_space<vmem>>, vector<8x128xf32>
    tpu.vector_store %arg6[%c0_14, %c0_15], %24 {strides = array<i32>} : memref<8x128xf32, #tpu.memory_space<vmem>>, vector<8x128xf32>,
    return
  }
  func.func @transform_0(%arg0: i32) -> (i32, i32) {
    %c0_i32 = arith.constant 0 : i32
    %c0_i32_0 = arith.constant 0 : i32
    return %arg0, %c0_i32 : i32, i32
  }
  func.func @transform_1(%arg0: i32) -> (i32, i32) {
    %c0_i32 = arith.constant 0 : i32
    %c0_i32_0 = arith.constant 0 : i32
    return %arg0, %c0_i32 : i32, i32
  }
  func.func @transform_2(%arg0: i32) -> (i32, i32) {
    %c0_i32 = arith.constant 0 : i32
    %c0_i32_0 = arith.constant 0 : i32
    %c0_i32_1 = arith.constant 0 : i32
    return %c0_i32, %c0_i32_0 : i32, i32
  }
  func.func @transform_3(%arg0: i32) -> (i32, i32) {
    %c0_i32 = arith.constant 0 : i32
    %c0_i32_0 = arith.constant 0 : i32
    %c0_i32_1 = arith.constant 0 : i32
    return %c0_i32, %c0_i32_0 : i32, i32
  }
  func.func @transform_4(%arg0: i32) -> (i32, i32) {
    %c0_i32 = arith.constant 0 : i32
    %c0_i32_0 = arith.constant 0 : i32
    %c0_i32_1 = arith.constant 0 : i32
    return %c0_i32, %c0_i32_0 : i32, i32
  }
  func.func @transform_5(%arg0: i32) -> (i32, i32) {
    %c0_i32 = arith.constant 0 : i32
    %c0_i32_0 = arith.constant 0 : i32
    return %arg0, %c0_i32 : i32, i32
  }
}

</mosaic_0001>

<llo_original>
// kernel: tpu_custom_call.1
$region0: #{tpu_custom_call.1}
  #allocation0 [shape = 'u32[]', space=smem, size = 0x4, offset = 0x4, fixed_abs, tag = 'smem constant byte address 0x4 - core index']
  #allocation1 [shape = 'u32[72,128]{1,0:T(1,128)}', space=vmem, size = 0x9000, scoped, tag = 'internal scratch']
  #allocation2 [shape = 'f32[1,1]{1,0:T(1,128)S(6)}', space=smem, size = 0x200, scoped, tag = 'scoped memory for tpu_custom_call.1']
  %s0 = inlined_call_operand.vmem [shape: f32[8,128], index: 0, kind: input, shape index: {}]
  %s1 = inlined_call_operand.vmem [shape: f32[8,128], index: 1, kind: input, shape index: {}]
  %s2 = inlined_call_operand.vmem [shape: f32[128,4], index: 2, kind: input, shape index: {}]
  %s3 = inlined_call_operand.vmem [shape: f32[4,128], index: 3, kind: input, shape index: {}]
  %s4 = inlined_call_operand.<no memory space> [shape: f32[1,1], index: 4, kind: input, shape index: {}]
  %s5 = inlined_call_operand.hbm [shape: f32[8,128], index: 5, kind: output, shape index: {}]
  %s6 = sld [smem:[#allocation0]]
  $region30: #{tpu_custom_call.1} parent=0
    _
  %s8 = ssub.s32 1, %s6
  %s9 = scalar_select 0, %s8, %s6
  %10 = sst [smem:[#allocation2]] %s4
  $region1: #{tpu_custom_call.1} parent=0
    #allocation3 [shape = 'u8[4096]{0}', space=vmem, size = 0x1000, scoped, tag = 'output window, operand 0, single buffered']
    #allocation4 [shape = 's32[1]{0}', space=sflag, size = 0x4, scoped, tag = 'scoped memory for tpu_custom_call.1']
    %11 = vsyncpa [#allocation4], 0
    // Predicated region
    $region2: #{tpu_custom_call.1} parent=1 // pred_check
      _
    $region3: #{tpu_custom_call.1} parent=1 // pred_check_branch
      %13 = sbr.rel (0) target = $region5
    $region4: #{tpu_custom_call.1} parent=1 // pred_region
      _
    $region5: #{tpu_custom_call.1} parent=1 // pred_fallthru
      _
    // Predicated region
    $region6: #{tpu_custom_call.1} parent=1 // pred_check
      _
    $region7: #{tpu_custom_call.1} parent=1 // pred_check_branch
      %15 = sbr.rel (0) target = $region9
    $region8: #{tpu_custom_call.1} parent=1 // pred_region
      _
    $region9: #{tpu_custom_call.1} parent=1 // pred_fallthru
      _
    // Predicated region
    $region10: #{tpu_custom_call.1} parent=1 // pred_check
      _
    $region11: #{tpu_custom_call.1} parent=1 // pred_check_branch
      %17 = sbr.rel (0) target = $region13
    $region12: #{tpu_custom_call.1} parent=1 // pred_region
      _
    $region13: #{tpu_custom_call.1} parent=1 // pred_fallthru
      _
    // Predicated region
    $region14: #{tpu_custom_call.1} parent=1 // pred_check
      _
    $region15: #{tpu_custom_call.1} parent=1 // pred_check_branch
      %19 = sbr.rel (0) target = $region17
    $region16: #{tpu_custom_call.1} parent=1 // pred_region
      _
    $region17: #{tpu_custom_call.1} parent=1 // pred_fallthru
      _
    // Predicated region
    $region18: #{tpu_custom_call.1} parent=1 // pred_check
      _
    $region19: #{tpu_custom_call.1} parent=1 // pred_check_branch
      %21 = sbr.rel (0) target = $region21
    $region20: #{tpu_custom_call.1} parent=1 // pred_region
      _
    $region21: #{tpu_custom_call.1} parent=1 // pred_fallthru
      _
    %v22 = vld [vmem:[%s0] sm:$0xff]
    %v23 = vld [vmem:[%s1] sm:$0xff]
    %v24 = vld [vmem:[%s2] sm:$0xff]
    %v25 = vld [vmem:[%s2 + $0x8] sm:$0xff]
    %v26 = vld [vmem:[%s2 + $0x10] sm:$0xff]
    %v27 = vld [vmem:[%s2 + $0x18] sm:$0xff]
    %v28 = vld [vmem:[%s2 + $0x20] sm:$0xff]
    %v29 = vld [vmem:[%s2 + $0x28] sm:$0xff]
    %v30 = vld [vmem:[%s2 + $0x30] sm:$0xff]
    %v31 = vld [vmem:[%s2 + $0x38] sm:$0xff]
    %v32 = vld [vmem:[%s2 + $0x40] sm:$0xff]
    %v33 = vld [vmem:[%s2 + $0x48] sm:$0xff]
    %v34 = vld [vmem:[%s2 + $0x50] sm:$0xff]
    %v35 = vld [vmem:[%s2 + $0x58] sm:$0xff]
    %v36 = vld [vmem:[%s2 + $0x60] sm:$0xff]
    %v37 = vld [vmem:[%s2 + $0x68] sm:$0xff]
    %v38 = vld [vmem:[%s2 + $0x70] sm:$0xff]
    %v39 = vld [vmem:[%s2 + $0x78] sm:$0xff]
    %v40 = vld [vmem:[%s3] sm:$0xf]
    %s41 = sld [smem:[#allocation2]]
    %v42 = vstv %s41
    %v43 = vand.u32 %v39, 4294901760
    %44 = vmatpush.msra.mxu0 %v43
    %v45 = vand.u32 %v38, 4294901760
    %46 = vmatpush.msra.mxu0 %v45
    %v47 = vand.u32 %v37, 4294901760
    %48 = vmatpush.msra.mxu0 %v47
    %v49 = vand.u32 %v36, 4294901760
    %50 = vmatpush.msra.mxu0 %v49
    %v51 = vand.u32 %v35, 4294901760
    %52 = vmatpush.msra.mxu0 %v51
    %v53 = vand.u32 %v34, 4294901760
    %54 = vmatpush.msra.mxu0 %v53
    %v55 = vand.u32 %v33, 4294901760
    %56 = vmatpush.msra.mxu0 %v55
    %v57 = vand.u32 %v32, 4294901760
    %58 = vmatpush.msra.mxu0 %v57
    %v59 = vand.u32 %v31, 4294901760
    %60 = vmatpush.msra.mxu0 %v59
    %v61 = vand.u32 %v30, 4294901760
    %62 = vmatpush.msra.mxu0 %v61
    %v63 = vand.u32 %v29, 4294901760
    %64 = vmatpush.msra.mxu0 %v63
    %v65 = vand.u32 %v28, 4294901760
    %66 = vmatpush.msra.mxu0 %v65
    %v67 = vand.u32 %v27, 4294901760
    %68 = vmatpush.msra.mxu0 %v67
    %v69 = vand.u32 %v26, 4294901760
    %70 = vmatpush.msra.mxu0 %v69
    %v71 = vand.u32 %v25, 4294901760
    %72 = vmatpush.msra.mxu0 %v71
    %v73 = vand.u32 %v24, 4294901760
    %74 = vmatpush.msra.mxu0 %v73
    %v75 = vand.u32 %v22, 4294901760
    %v76 = vsub.f32 %v22, %v75
    %v77 = vand.u32 %v76, 4294901760
    %v78 = vsub.f32 %v76, %v77
    %v79 = vand.u32 %v78, 4294901760
    %80 = vmatmul.f32.gmra.mxu0 %v79
    %v81 = vpop.f32.mrf.mxu0
    %v82 = vadd.f32 %v42, %v81
    %83 = vdwg.mxu0
    %v84 = vand.u32 %v39, 4294901760
    %v85 = vsub.f32 %v39, %v84
    %v86 = vand.u32 %v85, 4294901760
    %v87 = vsub.f32 %v85, %v86
    %v88 = vand.u32 %v87, 4294901760
    %89 = vmatpush.msra.mxu0 %v88
    %v90 = vand.u32 %v38, 4294901760
    %v91 = vsub.f32 %v38, %v90
    %v92 = vand.u32 %v91, 4294901760
    %v93 = vsub.f32 %v91, %v92
    %v94 = vand.u32 %v93, 4294901760
    %95 = vmatpush.msra.mxu0 %v94
    %v96 = vand.u32 %v37, 4294901760
    %v97 = vsub.f32 %v37, %v96
    %v98 = vand.u32 %v97, 4294901760
    %v99 = vsub.f32 %v97, %v98
    %v100 = vand.u32 %v99, 4294901760
    %101 = vmatpush.msra.mxu0 %v100
    %v102 = vand.u32 %v36, 4294901760
    %v103 = vsub.f32 %v36, %v102
    %v104 = vand.u32 %v103, 4294901760
    %v105 = vsub.f32 %v103, %v104
    %v106 = vand.u32 %v105, 4294901760
    %107 = vmatpush.msra.mxu0 %v106
    %v108 = vand.u32 %v35, 4294901760
    %v109 = vsub.f32 %v35, %v108
    %v110 = vand.u32 %v109, 4294901760
    %v111 = vsub.f32 %v109, %v110
    %v112 = vand.u32 %v111, 4294901760
    %113 = vmatpush.msra.mxu0 %v112
    %v114 = vand.u32 %v34, 4294901760
    %v115 = vsub.f32 %v34, %v114
    %v116 = vand.u32 %v115, 4294901760
    %v117 = vsub.f32 %v115, %v116
    %v118 = vand.u32 %v117, 4294901760
    %119 = vmatpush.msra.mxu0 %v118
    %v120 = vand.u32 %v33, 4294901760
    %v121 = vsub.f32 %v33, %v120
    %v122 = vand.u32 %v121, 4294901760
    %v123 = vsub.f32 %v121, %v122
    %v124 = vand.u32 %v123, 4294901760
    %125 = vmatpush.msra.mxu0 %v124
    %v126 = vand.u32 %v32, 4294901760
    %v127 = vsub.f32 %v32, %v126
    %v128 = vand.u32 %v127, 4294901760
    %v129 = vsub.f32 %v127, %v128
    %v130 = vand.u32 %v129, 4294901760
    %131 = vmatpush.msra.mxu0 %v130
    %v132 = vand.u32 %v31, 4294901760
    %v133 = vsub.f32 %v31, %v132
    %v134 = vand.u32 %v133, 4294901760
    %v135 = vsub.f32 %v133, %v134
    %v136 = vand.u32 %v135, 4294901760
    %137 = vmatpush.msra.mxu0 %v136
    %v138 = vand.u32 %v30, 4294901760
    %v139 = vsub.f32 %v30, %v138
    %v140 = vand.u32 %v139, 4294901760
    %v141 = vsub.f32 %v139, %v140
    %v142 = vand.u32 %v141, 4294901760
    %143 = vmatpush.msra.mxu0 %v142
    %v144 = vand.u32 %v29, 4294901760
    %v145 = vsub.f32 %v29, %v144
    %v146 = vand.u32 %v145, 4294901760
    %v147 = vsub.f32 %v145, %v146
    %v148 = vand.u32 %v147, 4294901760
    %149 = vmatpush.msra.mxu0 %v148
    %v150 = vand.u32 %v28, 4294901760
    %v151 = vsub.f32 %v28, %v150
    %v152 = vand.u32 %v151, 4294901760
    %v153 = vsub.f32 %v151, %v152
    %v154 = vand.u32 %v153, 4294901760
    %155 = vmatpush.msra.mxu0 %v154
    %v156 = vand.u32 %v27, 4294901760
    %v157 = vsub.f32 %v27, %v156
    %v158 = vand.u32 %v157, 4294901760
    %v159 = vsub.f32 %v157, %v158
    %v160 = vand.u32 %v159, 4294901760
    %161 = vmatpush.msra.mxu0 %v160
    %v162 = vand.u32 %v26, 4294901760
    %v163 = vsub.f32 %v26, %v162
    %v164 = vand.u32 %v163, 4294901760
    %v165 = vsub.f32 %v163, %v164
    %v166 = vand.u32 %v165, 4294901760
    %167 = vmatpush.msra.mxu0 %v166
    %v168 = vand.u32 %v25, 4294901760
    %v169 = vsub.f32 %v25, %v168
    %v170 = vand.u32 %v169, 4294901760
    %v171 = vsub.f32 %v169, %v170
    %v172 = vand.u32 %v171, 4294901760
    %173 = vmatpush.msra.mxu0 %v172
    %v174 = vand.u32 %v24, 4294901760
    %v175 = vsub.f32 %v24, %v174
    %v176 = vand.u32 %v175, 4294901760
    %v177 = vsub.f32 %v175, %v176
    %v178 = vand.u32 %v177, 4294901760
    %179 = vmatpush.msra.mxu0 %v178
    %v180 = vand.u32 %v22, 4294901760
    %181 = vmatmul.f32.gmra.mxu0 %v180
    %v182 = vpop.f32.mrf.mxu0
    %v183 = vadd.f32 %v82, %v182
    %184 = vdwg.mxu0
    %v185 = vand.u32 %v39, 4294901760
    %v186 = vsub.f32 %v39, %v185
    %187 = vmatpush.msra.mxu0 %v186
    %v188 = vand.u32 %v38, 4294901760
    %v189 = vsub.f32 %v38, %v188
    %190 = vmatpush.msra.mxu0 %v189
    %v191 = vand.u32 %v37, 4294901760
    %v192 = vsub.f32 %v37, %v191
    %193 = vmatpush.msra.mxu0 %v192
    %v194 = vand.u32 %v36, 4294901760
    %v195 = vsub.f32 %v36, %v194
    %196 = vmatpush.msra.mxu0 %v195
    %v197 = vand.u32 %v35, 4294901760
    %v198 = vsub.f32 %v35, %v197
    %199 = vmatpush.msra.mxu0 %v198
    %v200 = vand.u32 %v34, 4294901760
    %v201 = vsub.f32 %v34, %v200
    %202 = vmatpush.msra.mxu0 %v201
    %v203 = vand.u32 %v33, 4294901760
    %v204 = vsub.f32 %v33, %v203
    %205 = vmatpush.msra.mxu0 %v204
    %v206 = vand.u32 %v32, 4294901760
    %v207 = vsub.f32 %v32, %v206
    %208 = vmatpush.msra.mxu0 %v207
    %v209 = vand.u32 %v31, 4294901760
    %v210 = vsub.f32 %v31, %v209
    %211 = vmatpush.msra.mxu0 %v210
    %v212 = vand.u32 %v30, 4294901760
    %v213 = vsub.f32 %v30, %v212
    %214 = vmatpush.msra.mxu0 %v213
    %v215 = vand.u32 %v29, 4294901760
    %v216 = vsub.f32 %v29, %v215
    %217 = vmatpush.msra.mxu0 %v216
    %v218 = vand.u32 %v28, 4294901760
    %v219 = vsub.f32 %v28, %v218
    %220 = vmatpush.msra.mxu0 %v219
    %v221 = vand.u32 %v27, 4294901760
    %v222 = vsub.f32 %v27, %v221
    %223 = vmatpush.msra.mxu0 %v222
    %v224 = vand.u32 %v26, 4294901760
    %v225 = vsub.f32 %v26, %v224
    %226 = vmatpush.msra.mxu0 %v225
    %v227 = vand.u32 %v25, 4294901760
    %v228 = vsub.f32 %v25, %v227
    %229 = vmatpush.msra.mxu0 %v228
    %v230 = vand.u32 %v24, 4294901760
    %v231 = vsub.f32 %v24, %v230
    %232 = vmatpush.msra.mxu0 %v231
    %v233 = vand.u32 %v22, 4294901760
    %v234 = vsub.f32 %v22, %v233
    %235 = vmatmul.f32.gmra.mxu0 %v234
    %v236 = vpop.f32.mrf.mxu0
    %v237 = vadd.f32 %v183, %v236
    %238 = vdwg.mxu0
    %v239 = vand.u32 %v39, 4294901760
    %240 = vmatpush.msra.mxu0 %v239
    %v241 = vand.u32 %v38, 4294901760
    %242 = vmatpush.msra.mxu0 %v241
    %v243 = vand.u32 %v37, 4294901760
    %244 = vmatpush.msra.mxu0 %v243
    %v245 = vand.u32 %v36, 4294901760
    %246 = vmatpush.msra.mxu0 %v245
    %v247 = vand.u32 %v35, 4294901760
    %248 = vmatpush.msra.mxu0 %v247
    %v249 = vand.u32 %v34, 4294901760
    %250 = vmatpush.msra.mxu0 %v249
    %v251 = vand.u32 %v33, 4294901760
    %252 = vmatpush.msra.mxu0 %v251
    %v253 = vand.u32 %v32, 4294901760
    %254 = vmatpush.msra.mxu0 %v253
    %v255 = vand.u32 %v31, 4294901760
    %256 = vmatpush.msra.mxu0 %v255
    %v257 = vand.u32 %v30, 4294901760
    %258 = vmatpush.msra.mxu0 %v257
    %v259 = vand.u32 %v29, 4294901760
    %260 = vmatpush.msra.mxu0 %v259
    %v261 = vand.u32 %v28, 4294901760
    %262 = vmatpush.msra.mxu0 %v261
    %v263 = vand.u32 %v27, 4294901760
    %264 = vmatpush.msra.mxu0 %v263
    %v265 = vand.u32 %v26, 4294901760
    %266 = vmatpush.msra.mxu0 %v265
    %v267 = vand.u32 %v25, 4294901760
    %268 = vmatpush.msra.mxu0 %v267
    %v269 = vand.u32 %v24, 4294901760
    %270 = vmatpush.msra.mxu0 %v269
    %v271 = vand.u32 %v22, 4294901760
    %v272 = vsub.f32 %v22, %v271
    %v273 = vand.u32 %v272, 4294901760
    %274 = vmatmul.f32.gmra.mxu0 %v273
    %v275 = vpop.f32.mrf.mxu0
    %v276 = vadd.f32 %v237, %v275
    %277 = vdwg.mxu0
    %v278 = vand.u32 %v39, 4294901760
    %v279 = vsub.f32 %v39, %v278
    %v280 = vand.u32 %v279, 4294901760
    %281 = vmatpush.msra.mxu0 %v280
    %v282 = vand.u32 %v38, 4294901760
    %v283 = vsub.f32 %v38, %v282
    %v284 = vand.u32 %v283, 4294901760
    %285 = vmatpush.msra.mxu0 %v284
    %v286 = vand.u32 %v37, 4294901760
    %v287 = vsub.f32 %v37, %v286
    %v288 = vand.u32 %v287, 4294901760
    %289 = vmatpush.msra.mxu0 %v288
    %v290 = vand.u32 %v36, 4294901760
    %v291 = vsub.f32 %v36, %v290
    %v292 = vand.u32 %v291, 4294901760
    %293 = vmatpush.msra.mxu0 %v292
    %v294 = vand.u32 %v35, 4294901760
    %v295 = vsub.f32 %v35, %v294
    %v296 = vand.u32 %v295, 4294901760
    %297 = vmatpush.msra.mxu0 %v296
    %v298 = vand.u32 %v34, 4294901760
    %v299 = vsub.f32 %v34, %v298
    %v300 = vand.u32 %v299, 4294901760
    %301 = vmatpush.msra.mxu0 %v300
    %v302 = vand.u32 %v33, 4294901760
    %v303 = vsub.f32 %v33, %v302
    %v304 = vand.u32 %v303, 4294901760
    %305 = vmatpush.msra.mxu0 %v304
    %v306 = vand.u32 %v32, 4294901760
    %v307 = vsub.f32 %v32, %v306
    %v308 = vand.u32 %v307, 4294901760
    %309 = vmatpush.msra.mxu0 %v308
    %v310 = vand.u32 %v31, 4294901760
    %v311 = vsub.f32 %v31, %v310
    %v312 = vand.u32 %v311, 4294901760
    %313 = vmatpush.msra.mxu0 %v312
    %v314 = vand.u32 %v30, 4294901760
    %v315 = vsub.f32 %v30, %v314
    %v316 = vand.u32 %v315, 4294901760
    %317 = vmatpush.msra.mxu0 %v316
    %v318 = vand.u32 %v29, 4294901760
    %v319 = vsub.f32 %v29, %v318
    %v320 = vand.u32 %v319, 4294901760
    %321 = vmatpush.msra.mxu0 %v320
    %v322 = vand.u32 %v28, 4294901760
    %v323 = vsub.f32 %v28, %v322
    %v324 = vand.u32 %v323, 4294901760
    %325 = vmatpush.msra.mxu0 %v324
    %v326 = vand.u32 %v27, 4294901760
    %v327 = vsub.f32 %v27, %v326
    %v328 = vand.u32 %v327, 4294901760
    %329 = vmatpush.msra.mxu0 %v328
    %v330 = vand.u32 %v26, 4294901760
    %v331 = vsub.f32 %v26, %v330
    %v332 = vand.u32 %v331, 4294901760
    %333 = vmatpush.msra.mxu0 %v332
    %v334 = vand.u32 %v25, 4294901760
    %v335 = vsub.f32 %v25, %v334
    %v336 = vand.u32 %v335, 4294901760
    %337 = vmatpush.msra.mxu0 %v336
    %v338 = vand.u32 %v24, 4294901760
    %v339 = vsub.f32 %v24, %v338
    %v340 = vand.u32 %v339, 4294901760
    %341 = vmatpush.msra.mxu0 %v340
    %v342 = vand.u32 %v22, 4294901760
    %343 = vmatmul.f32.gmra.mxu0 %v342
    %v344 = vpop.f32.mrf.mxu0
    %v345 = vadd.f32 %v276, %v344
    %346 = vdwg.mxu0
    %v347 = vand.u32 %v39, 4294901760
    %348 = vmatpush.msra.mxu0 %v347
    %v349 = vand.u32 %v38, 4294901760
    %350 = vmatpush.msra.mxu0 %v349
    %v351 = vand.u32 %v37, 4294901760
    %352 = vmatpush.msra.mxu0 %v351
    %v353 = vand.u32 %v36, 4294901760
    %354 = vmatpush.msra.mxu0 %v353
    %v355 = vand.u32 %v35, 4294901760
    %356 = vmatpush.msra.mxu0 %v355
    %v357 = vand.u32 %v34, 4294901760
    %358 = vmatpush.msra.mxu0 %v357
    %v359 = vand.u32 %v33, 4294901760
    %360 = vmatpush.msra.mxu0 %v359
    %v361 = vand.u32 %v32, 4294901760
    %362 = vmatpush.msra.mxu0 %v361
    %v363 = vand.u32 %v31, 4294901760
    %364 = vmatpush.msra.mxu0 %v363
    %v365 = vand.u32 %v30, 4294901760
    %366 = vmatpush.msra.mxu0 %v365
    %v367 = vand.u32 %v29, 4294901760
    %368 = vmatpush.msra.mxu0 %v367
    %v369 = vand.u32 %v28, 4294901760
    %370 = vmatpush.msra.mxu0 %v369
    %v371 = vand.u32 %v27, 4294901760
    %372 = vmatpush.msra.mxu0 %v371
    %v373 = vand.u32 %v26, 4294901760
    %374 = vmatpush.msra.mxu0 %v373
    %v375 = vand.u32 %v25, 4294901760
    %376 = vmatpush.msra.mxu0 %v375
    %v377 = vand.u32 %v24, 4294901760
    %378 = vmatpush.msra.mxu0 %v377
    %v379 = vand.u32 %v22, 4294901760
    %380 = vmatmul.f32.gmra.mxu0 %v379
    %v381 = vpop.f32.mrf.mxu0
    %v382 = vadd.f32 %v345, %v381
    %383 = vdwg.mxu0
    %v384 = vtanh.pop %v382
    %v385 = vand.u32 %v39, 4294901760
    %386 = vmatpush.msra.mxu0 %v385
    %v387 = vand.u32 %v38, 4294901760
    %388 = vmatpush.msra.mxu0 %v387
    %v389 = vand.u32 %v37, 4294901760
    %390 = vmatpush.msra.mxu0 %v389
    %v391 = vand.u32 %v36, 4294901760
    %392 = vmatpush.msra.mxu0 %v391
    %v393 = vand.u32 %v35, 4294901760
    %394 = vmatpush.msra.mxu0 %v393
    %v395 = vand.u32 %v34, 4294901760
    %396 = vmatpush.msra.mxu0 %v395
    %v397 = vand.u32 %v33, 4294901760
    %398 = vmatpush.msra.mxu0 %v397
    %v399 = vand.u32 %v32, 4294901760
    %400 = vmatpush.msra.mxu0 %v399
    %v401 = vand.u32 %v31, 4294901760
    %402 = vmatpush.msra.mxu0 %v401
    %v403 = vand.u32 %v30, 4294901760
    %404 = vmatpush.msra.mxu0 %v403
    %v405 = vand.u32 %v29, 4294901760
    %406 = vmatpush.msra.mxu0 %v405
    %v407 = vand.u32 %v28, 4294901760
    %408 = vmatpush.msra.mxu0 %v407
    %v409 = vand.u32 %v27, 4294901760
    %410 = vmatpush.msra.mxu0 %v409
    %v411 = vand.u32 %v26, 4294901760
    %412 = vmatpush.msra.mxu0 %v411
    %v413 = vand.u32 %v25, 4294901760
    %414 = vmatpush.msra.mxu0 %v413
    %v415 = vand.u32 %v24, 4294901760
    %416 = vmatpush.msra.mxu0 %v415
    %v417 = vand.u32 %v23, 4294901760
    %v418 = vsub.f32 %v23, %v417
    %v419 = vand.u32 %v418, 4294901760
    %v420 = vsub.f32 %v418, %v419
    %v421 = vand.u32 %v420, 4294901760
    %422 = vmatmul.f32.gmra.mxu0 %v421
    %v423 = vpop.f32.mrf.mxu0
    %v424 = vadd.f32 %v42, %v423
    %425 = vdwg.mxu0
    %v426 = vand.u32 %v39, 4294901760
    %v427 = vsub.f32 %v39, %v426
    %v428 = vand.u32 %v427, 4294901760
    %v429 = vsub.f32 %v427, %v428
    %v430 = vand.u32 %v429, 4294901760
    %431 = vmatpush.msra.mxu0 %v430
    %v432 = vand.u32 %v38, 4294901760
    %v433 = vsub.f32 %v38, %v432
    %v434 = vand.u32 %v433, 4294901760
    %v435 = vsub.f32 %v433, %v434
    %v436 = vand.u32 %v435, 4294901760
    %437 = vmatpush.msra.mxu0 %v436
    %v438 = vand.u32 %v37, 4294901760
    %v439 = vsub.f32 %v37, %v438
    %v440 = vand.u32 %v439, 4294901760
    %v441 = vsub.f32 %v439, %v440
    %v442 = vand.u32 %v441, 4294901760
    %443 = vmatpush.msra.mxu0 %v442
    %v444 = vand.u32 %v36, 4294901760
    %v445 = vsub.f32 %v36, %v444
    %v446 = vand.u32 %v445, 4294901760
    %v447 = vsub.f32 %v445, %v446
    %v448 = vand.u32 %v447, 4294901760
    %449 = vmatpush.msra.mxu0 %v448
    %v450 = vand.u32 %v35, 4294901760
    %v451 = vsub.f32 %v35, %v450
    %v452 = vand.u32 %v451, 4294901760
    %v453 = vsub.f32 %v451, %v452
    %v454 = vand.u32 %v453, 4294901760
    %455 = vmatpush.msra.mxu0 %v454
    %v456 = vand.u32 %v34, 4294901760
    %v457 = vsub.f32 %v34, %v456
    %v458 = vand.u32 %v457, 4294901760
    %v459 = vsub.f32 %v457, %v458
    %v460 = vand.u32 %v459, 4294901760
    %461 = vmatpush.msra.mxu0 %v460
    %v462 = vand.u32 %v33, 4294901760
    %v463 = vsub.f32 %v33, %v462
    %v464 = vand.u32 %v463, 4294901760
    %v465 = vsub.f32 %v463, %v464
    %v466 = vand.u32 %v465, 4294901760
    %467 = vmatpush.msra.mxu0 %v466
    %v468 = vand.u32 %v32, 4294901760
    %v469 = vsub.f32 %v32, %v468
    %v470 = vand.u32 %v469, 4294901760
    %v471 = vsub.f32 %v469, %v470
    %v472 = vand.u32 %v471, 4294901760
    %473 = vmatpush.msra.mxu0 %v472
    %v474 = vand.u32 %v31, 4294901760
    %v475 = vsub.f32 %v31, %v474
    %v476 = vand.u32 %v475, 4294901760
    %v477 = vsub.f32 %v475, %v476
    %v478 = vand.u32 %v477, 4294901760
    %479 = vmatpush.msra.mxu0 %v478
    %v480 = vand.u32 %v30, 4294901760
    %v481 = vsub.f32 %v30, %v480
    %v482 = vand.u32 %v481, 4294901760
    %v483 = vsub.f32 %v481, %v482
    %v484 = vand.u32 %v483, 4294901760
    %485 = vmatpush.msra.mxu0 %v484
    %v486 = vand.u32 %v29, 4294901760
    %v487 = vsub.f32 %v29, %v486
    %v488 = vand.u32 %v487, 4294901760
    %v489 = vsub.f32 %v487, %v488
    %v490 = vand.u32 %v489, 4294901760
    %491 = vmatpush.msra.mxu0 %v490
    %v492 = vand.u32 %v28, 4294901760
    %v493 = vsub.f32 %v28, %v492
    %v494 = vand.u32 %v493, 4294901760
    %v495 = vsub.f32 %v493, %v494
    %v496 = vand.u32 %v495, 4294901760
    %497 = vmatpush.msra.mxu0 %v496
    %v498 = vand.u32 %v27, 4294901760
    %v499 = vsub.f32 %v27, %v498
    %v500 = vand.u32 %v499, 4294901760
    %v501 = vsub.f32 %v499, %v500
    %v502 = vand.u32 %v501, 4294901760
    %503 = vmatpush.msra.mxu0 %v502
    %v504 = vand.u32 %v26, 4294901760
    %v505 = vsub.f32 %v26, %v504
    %v506 = vand.u32 %v505, 4294901760
    %v507 = vsub.f32 %v505, %v506
    %v508 = vand.u32 %v507, 4294901760
    %509 = vmatpush.msra.mxu0 %v508
    %v510 = vand.u32 %v25, 4294901760
    %v511 = vsub.f32 %v25, %v510
    %v512 = vand.u32 %v511, 4294901760
    %v513 = vsub.f32 %v511, %v512
    %v514 = vand.u32 %v513, 4294901760
    %515 = vmatpush.msra.mxu0 %v514
    %v516 = vand.u32 %v24, 4294901760
    %v517 = vsub.f32 %v24, %v516
    %v518 = vand.u32 %v517, 4294901760
    %v519 = vsub.f32 %v517, %v518
    %v520 = vand.u32 %v519, 4294901760
    %521 = vmatpush.msra.mxu0 %v520
    %v522 = vand.u32 %v23, 4294901760
    %523 = vmatmul.f32.gmra.mxu0 %v522
    %v524 = vpop.f32.mrf.mxu0
    %v525 = vadd.f32 %v424, %v524
    %526 = vdwg.mxu0
    %v527 = vand.u32 %v39, 4294901760
    %v528 = vsub.f32 %v39, %v527
    %529 = vmatpush.msra.mxu0 %v528
    %v530 = vand.u32 %v38, 4294901760
    %v531 = vsub.f32 %v38, %v530
    %532 = vmatpush.msra.mxu0 %v531
    %v533 = vand.u32 %v37, 4294901760
    %v534 = vsub.f32 %v37, %v533
    %535 = vmatpush.msra.mxu0 %v534
    %v536 = vand.u32 %v36, 4294901760
    %v537 = vsub.f32 %v36, %v536
    %538 = vmatpush.msra.mxu0 %v537
    %v539 = vand.u32 %v35, 4294901760
    %v540 = vsub.f32 %v35, %v539
    %541 = vmatpush.msra.mxu0 %v540
    %v542 = vand.u32 %v34, 4294901760
    %v543 = vsub.f32 %v34, %v542
    %544 = vmatpush.msra.mxu0 %v543
    %v545 = vand.u32 %v33, 4294901760
    %v546 = vsub.f32 %v33, %v545
    %547 = vmatpush.msra.mxu0 %v546
    %v548 = vand.u32 %v32, 4294901760
    %v549 = vsub.f32 %v32, %v548
    %550 = vmatpush.msra.mxu0 %v549
    %v551 = vand.u32 %v31, 4294901760
    %v552 = vsub.f32 %v31, %v551
    %553 = vmatpush.msra.mxu0 %v552
    %v554 = vand.u32 %v30, 4294901760
    %v555 = vsub.f32 %v30, %v554
    %556 = vmatpush.msra.mxu0 %v555
    %v557 = vand.u32 %v29, 4294901760
    %v558 = vsub.f32 %v29, %v557
    %559 = vmatpush.msra.mxu0 %v558
    %v560 = vand.u32 %v28, 4294901760
    %v561 = vsub.f32 %v28, %v560
    %562 = vmatpush.msra.mxu0 %v561
    %v563 = vand.u32 %v27, 4294901760
    %v564 = vsub.f32 %v27, %v563
    %565 = vmatpush.msra.mxu0 %v564
    %v566 = vand.u32 %v26, 4294901760
    %v567 = vsub.f32 %v26, %v566
    %568 = vmatpush.msra.mxu0 %v567
    %v569 = vand.u32 %v25, 4294901760
    %v570 = vsub.f32 %v25, %v569
    %571 = vmatpush.msra.mxu0 %v570
    %v572 = vand.u32 %v24, 4294901760
    %v573 = vsub.f32 %v24, %v572
    %574 = vmatpush.msra.mxu0 %v573
    %v575 = vand.u32 %v23, 4294901760
    %v576 = vsub.f32 %v23, %v575
    %577 = vmatmul.f32.gmra.mxu0 %v576
    %v578 = vpop.f32.mrf.mxu0
    %v579 = vadd.f32 %v525, %v578
    %580 = vdwg.mxu0
    %v581 = vand.u32 %v39, 4294901760
    %582 = vmatpush.msra.mxu0 %v581
    %v583 = vand.u32 %v38, 4294901760
    %584 = vmatpush.msra.mxu0 %v583
    %v585 = vand.u32 %v37, 4294901760
    %586 = vmatpush.msra.mxu0 %v585
    %v587 = vand.u32 %v36, 4294901760
    %588 = vmatpush.msra.mxu0 %v587
    %v589 = vand.u32 %v35, 4294901760
    %590 = vmatpush.msra.mxu0 %v589
    %v591 = vand.u32 %v34, 4294901760
    %592 = vmatpush.msra.mxu0 %v591
    %v593 = vand.u32 %v33, 4294901760
    %594 = vmatpush.msra.mxu0 %v593
    %v595 = vand.u32 %v32, 4294901760
    %596 = vmatpush.msra.mxu0 %v595
    %v597 = vand.u32 %v31, 4294901760
    %598 = vmatpush.msra.mxu0 %v597
    %v599 = vand.u32 %v30, 4294901760
    %600 = vmatpush.msra.mxu0 %v599
    %v601 = vand.u32 %v29, 4294901760
    %602 = vmatpush.msra.mxu0 %v601
    %v603 = vand.u32 %v28, 4294901760
    %604 = vmatpush.msra.mxu0 %v603
    %v605 = vand.u32 %v27, 4294901760
    %606 = vmatpush.msra.mxu0 %v605
    %v607 = vand.u32 %v26, 4294901760
    %608 = vmatpush.msra.mxu0 %v607
    %v609 = vand.u32 %v25, 4294901760
    %610 = vmatpush.msra.mxu0 %v609
    %v611 = vand.u32 %v24, 4294901760
    %612 = vmatpush.msra.mxu0 %v611
    %v613 = vand.u32 %v23, 4294901760
    %v614 = vsub.f32 %v23, %v613
    %v615 = vand.u32 %v614, 4294901760
    %616 = vmatmul.f32.gmra.mxu0 %v615
    %v617 = vpop.f32.mrf.mxu0
    %v618 = vadd.f32 %v579, %v617
    %619 = vdwg.mxu0
    %v620 = vand.u32 %v39, 4294901760
    %v621 = vsub.f32 %v39, %v620
    %v622 = vand.u32 %v621, 4294901760
    %623 = vmatpush.msra.mxu0 %v622
    %v624 = vand.u32 %v38, 4294901760
    %v625 = vsub.f32 %v38, %v624
    %v626 = vand.u32 %v625, 4294901760
    %627 = vmatpush.msra.mxu0 %v626
    %v628 = vand.u32 %v37, 4294901760
    %v629 = vsub.f32 %v37, %v628
    %v630 = vand.u32 %v629, 4294901760
    %631 = vmatpush.msra.mxu0 %v630
    %v632 = vand.u32 %v36, 4294901760
    %v633 = vsub.f32 %v36, %v632
    %v634 = vand.u32 %v633, 4294901760
    %635 = vmatpush.msra.mxu0 %v634
    %v636 = vand.u32 %v35, 4294901760
    %v637 = vsub.f32 %v35, %v636
    %v638 = vand.u32 %v637, 4294901760
    %639 = vmatpush.msra.mxu0 %v638
    %v640 = vand.u32 %v34, 4294901760
    %v641 = vsub.f32 %v34, %v640
    %v642 = vand.u32 %v641, 4294901760
    %643 = vmatpush.msra.mxu0 %v642
    %v644 = vand.u32 %v33, 4294901760
    %v645 = vsub.f32 %v33, %v644
    %v646 = vand.u32 %v645, 4294901760
    %647 = vmatpush.msra.mxu0 %v646
    %v648 = vand.u32 %v32, 4294901760
    %v649 = vsub.f32 %v32, %v648
    %v650 = vand.u32 %v649, 4294901760
    %651 = vmatpush.msra.mxu0 %v650
    %v652 = vand.u32 %v31, 4294901760
    %v653 = vsub.f32 %v31, %v652
    %v654 = vand.u32 %v653, 4294901760
    %655 = vmatpush.msra.mxu0 %v654
    %v656 = vand.u32 %v30, 4294901760
    %v657 = vsub.f32 %v30, %v656
    %v658 = vand.u32 %v657, 4294901760
    %659 = vmatpush.msra.mxu0 %v658
    %v660 = vand.u32 %v29, 4294901760
    %v661 = vsub.f32 %v29, %v660
    %v662 = vand.u32 %v661, 4294901760
    %663 = vmatpush.msra.mxu0 %v662
    %v664 = vand.u32 %v28, 4294901760
    %v665 = vsub.f32 %v28, %v664
    %v666 = vand.u32 %v665, 4294901760
    %667 = vmatpush.msra.mxu0 %v666
    %v668 = vand.u32 %v27, 4294901760
    %v669 = vsub.f32 %v27, %v668
    %v670 = vand.u32 %v669, 4294901760
    %671 = vmatpush.msra.mxu0 %v670
    %v672 = vand.u32 %v26, 4294901760
    %v673 = vsub.f32 %v26, %v672
    %v674 = vand.u32 %v673, 4294901760
    %675 = vmatpush.msra.mxu0 %v674
    %v676 = vand.u32 %v25, 4294901760
    %v677 = vsub.f32 %v25, %v676
    %v678 = vand.u32 %v677, 4294901760
    %679 = vmatpush.msra.mxu0 %v678
    %v680 = vand.u32 %v24, 4294901760
    %v681 = vsub.f32 %v24, %v680
    %v682 = vand.u32 %v681, 4294901760
    %683 = vmatpush.msra.mxu0 %v682
    %v684 = vand.u32 %v23, 4294901760
    %685 = vmatmul.f32.gmra.mxu0 %v684
    %v686 = vpop.f32.mrf.mxu0
    %v687 = vadd.f32 %v618, %v686
    %688 = vdwg.mxu0
    %v689 = vand.u32 %v39, 4294901760
    %690 = vmatpush.msra.mxu0 %v689
    %v691 = vand.u32 %v38, 4294901760
    %692 = vmatpush.msra.mxu0 %v691
    %v693 = vand.u32 %v37, 4294901760
    %694 = vmatpush.msra.mxu0 %v693
    %v695 = vand.u32 %v36, 4294901760
    %696 = vmatpush.msra.mxu0 %v695
    %v697 = vand.u32 %v35, 4294901760
    %698 = vmatpush.msra.mxu0 %v697
    %v699 = vand.u32 %v34, 4294901760
    %700 = vmatpush.msra.mxu0 %v699
    %v701 = vand.u32 %v33, 4294901760
    %702 = vmatpush.msra.mxu0 %v701
    %v703 = vand.u32 %v32, 4294901760
    %704 = vmatpush.msra.mxu0 %v703
    %v705 = vand.u32 %v31, 4294901760
    %706 = vmatpush.msra.mxu0 %v705
    %v707 = vand.u32 %v30, 4294901760
    %708 = vmatpush.msra.mxu0 %v707
    %v709 = vand.u32 %v29, 4294901760
    %710 = vmatpush.msra.mxu0 %v709
    %v711 = vand.u32 %v28, 4294901760
    %712 = vmatpush.msra.mxu0 %v711
    %v713 = vand.u32 %v27, 4294901760
    %714 = vmatpush.msra.mxu0 %v713
    %v715 = vand.u32 %v26, 4294901760
    %716 = vmatpush.msra.mxu0 %v715
    %v717 = vand.u32 %v25, 4294901760
    %718 = vmatpush.msra.mxu0 %v717
    %v719 = vand.u32 %v24, 4294901760
    %720 = vmatpush.msra.mxu0 %v719
    %v721 = vand.u32 %v23, 4294901760
    %722 = vmatmul.f32.gmra.mxu0 %v721
    %v723 = vpop.f32.mrf.mxu0
    %v724 = vadd.f32 %v687, %v723
    %725 = vdwg.mxu0
    %v726 = vtanh.pop %v724
    %v727 = vsub.f32 %v384, %v726
    %v728 = vsub.f32 0.0, %v727
    %v729 = vmul.f32 %v728, 1.442695
    %v730 = vpow.pop %v729
    %v731 = vadd.f32 %v730, 1.0
    %v732 = vrcp.pop %v731
    %v733 = vmul.f32 %v731, %v732
    %v734 = vsub.f32 1.0, %v733
    %v735 = vmul.f32 %v732, %v734
    %v736 = vadd.f32 %v732, %v735
    %vm737 = vweird.f32 %v731
    %vm738 = vweird.f32 %v732
    %vm739 = vmor %vm737, %vm738
    %v740 = vsel %vm739, %v732, %v736
    %v741 = vand.u32 2147483647, %v731
    %vm742 = vcmp.eq.f32.partialorder %v741, 8.507059e+37
    %v743 = vand.u32 %v731, 2147483648
    %v744 = vor.u32 1.1754944e-38, %v743
    %v745 = vsel %vm742, %v744, %v740
    %v746 = vmul.f32 1.0, %v745
    %vm747 = vcmask 31744
    %v749 = vsel %vm747, %v746, 0
    %vm751 = vcmask 1043456
    %v753 = vsel %vm751, %v40, 0
    %755 = vmatpush.msra.mxu0 0.0
    %756 = vmatpush.msra.mxu0 0.0
    %757 = vmatpush.msra.mxu0 0.0
    %758 = vmatpush.msra.mxu0 0.0
    %759 = vmatpush.msra.mxu0 0.0
    %760 = vmatpush.msra.mxu0 0.0
    %761 = vmatpush.msra.mxu0 0.0
    %762 = vmatpush.msra.mxu0 0.0
    %763 = vmatpush.msra.mxu0 0.0
    %764 = vmatpush.msra.mxu0 0.0
    %765 = vmatpush.msra.mxu0 0.0
    %766 = vmatpush.msra.mxu0 0.0
    %767 = vmatpush.msra.mxu0 0.0
    %768 = vmatpush.msra.mxu0 0.0
    %769 = vmatpush.msra.mxu0 0.0
    %v770 = vand.u32 %v753, 4294901760
    %771 = vmatpush.msra.mxu0 %v770
    %v772 = vand.u32 %v749, 4294901760
    %v773 = vsub.f32 %v749, %v772
    %v774 = vand.u32 %v773, 4294901760
    %v775 = vsub.f32 %v773, %v774
    %v776 = vand.u32 %v775, 4294901760
    %777 = vmatmul.f32.gmra.mxu0 %v776
    %v778 = vpop.f32.mrf.mxu0
    %v779 = vadd.f32 0.0, %v778
    %780 = vdwg.mxu0
    %781 = vmatpush.msra.mxu0 0.0
    %782 = vmatpush.msra.mxu0 0.0
    %783 = vmatpush.msra.mxu0 0.0
    %784 = vmatpush.msra.mxu0 0.0
    %785 = vmatpush.msra.mxu0 0.0
    %786 = vmatpush.msra.mxu0 0.0
    %787 = vmatpush.msra.mxu0 0.0
    %788 = vmatpush.msra.mxu0 0.0
    %789 = vmatpush.msra.mxu0 0.0
    %790 = vmatpush.msra.mxu0 0.0
    %791 = vmatpush.msra.mxu0 0.0
    %792 = vmatpush.msra.mxu0 0.0
    %793 = vmatpush.msra.mxu0 0.0
    %794 = vmatpush.msra.mxu0 0.0
    %795 = vmatpush.msra.mxu0 0.0
    %v796 = vand.u32 %v753, 4294901760
    %v797 = vsub.f32 %v753, %v796
    %v798 = vand.u32 %v797, 4294901760
    %v799 = vsub.f32 %v797, %v798
    %v800 = vand.u32 %v799, 4294901760
    %801 = vmatpush.msra.mxu0 %v800
    %v802 = vand.u32 %v749, 4294901760
    %803 = vmatmul.f32.gmra.mxu0 %v802
    %v804 = vpop.f32.mrf.mxu0
    %v805 = vadd.f32 %v779, %v804
    %806 = vdwg.mxu0
    %807 = vmatpush.msra.mxu0 0.0
    %808 = vmatpush.msra.mxu0 0.0
    %809 = vmatpush.msra.mxu0 0.0
    %810 = vmatpush.msra.mxu0 0.0
    %811 = vmatpush.msra.mxu0 0.0
    %812 = vmatpush.msra.mxu0 0.0
    %813 = vmatpush.msra.mxu0 0.0
    %814 = vmatpush.msra.mxu0 0.0
    %815 = vmatpush.msra.mxu0 0.0
    %816 = vmatpush.msra.mxu0 0.0
    %817 = vmatpush.msra.mxu0 0.0
    %818 = vmatpush.msra.mxu0 0.0
    %819 = vmatpush.msra.mxu0 0.0
    %820 = vmatpush.msra.mxu0 0.0
    %821 = vmatpush.msra.mxu0 0.0
    %v822 = vand.u32 %v753, 4294901760
    %v823 = vsub.f32 %v753, %v822
    %824 = vmatpush.msra.mxu0 %v823
    %v825 = vand.u32 %v749, 4294901760
    %v826 = vsub.f32 %v749, %v825
    %827 = vmatmul.f32.gmra.mxu0 %v826
    %v828 = vpop.f32.mrf.mxu0
    %v829 = vadd.f32 %v805, %v828
    %830 = vdwg.mxu0
    %831 = vmatpush.msra.mxu0 0.0
    %832 = vmatpush.msra.mxu0 0.0
    %833 = vmatpush.msra.mxu0 0.0
    %834 = vmatpush.msra.mxu0 0.0
    %835 = vmatpush.msra.mxu0 0.0
    %836 = vmatpush.msra.mxu0 0.0
    %837 = vmatpush.msra.mxu0 0.0
    %838 = vmatpush.msra.mxu0 0.0
    %839 = vmatpush.msra.mxu0 0.0
    %840 = vmatpush.msra.mxu0 0.0
    %841 = vmatpush.msra.mxu0 0.0
    %842 = vmatpush.msra.mxu0 0.0
    %843 = vmatpush.msra.mxu0 0.0
    %844 = vmatpush.msra.mxu0 0.0
    %845 = vmatpush.msra.mxu0 0.0
    %v846 = vand.u32 %v753, 4294901760
    %847 = vmatpush.msra.mxu0 %v846
    %v848 = vand.u32 %v749, 4294901760
    %v849 = vsub.f32 %v749, %v848
    %v850 = vand.u32 %v849, 4294901760
    %851 = vmatmul.f32.gmra.mxu0 %v850
    %v852 = vpop.f32.mrf.mxu0
    %v853 = vadd.f32 %v829, %v852
    %854 = vdwg.mxu0
    %855 = vmatpush.msra.mxu0 0.0
    %856 = vmatpush.msra.mxu0 0.0
    %857 = vmatpush.msra.mxu0 0.0
    %858 = vmatpush.msra.mxu0 0.0
    %859 = vmatpush.msra.mxu0 0.0
    %860 = vmatpush.msra.mxu0 0.0
    %861 = vmatpush.msra.mxu0 0.0
    %862 = vmatpush.msra.mxu0 0.0
    %863 = vmatpush.msra.mxu0 0.0
    %864 = vmatpush.msra.mxu0 0.0
    %865 = vmatpush.msra.mxu0 0.0
    %866 = vmatpush.msra.mxu0 0.0
    %867 = vmatpush.msra.mxu0 0.0
    %868 = vmatpush.msra.mxu0 0.0
    %869 = vmatpush.msra.mxu0 0.0
    %v870 = vand.u32 %v753, 4294901760
    %v871 = vsub.f32 %v753, %v870
    %v872 = vand.u32 %v871, 4294901760
    %873 = vmatpush.msra.mxu0 %v872
    %v874 = vand.u32 %v749, 4294901760
    %875 = vmatmul.f32.gmra.mxu0 %v874
    %v876 = vpop.f32.mrf.mxu0
    %v877 = vadd.f32 %v853, %v876
    %878 = vdwg.mxu0
    %879 = vmatpush.msra.mxu0 0.0
    %880 = vmatpush.msra.mxu0 0.0
    %881 = vmatpush.msra.mxu0 0.0
    %882 = vmatpush.msra.mxu0 0.0
    %883 = vmatpush.msra.mxu0 0.0
    %884 = vmatpush.msra.mxu0 0.0
    %885 = vmatpush.msra.mxu0 0.0
    %886 = vmatpush.msra.mxu0 0.0
    %887 = vmatpush.msra.mxu0 0.0
    %888 = vmatpush.msra.mxu0 0.0
    %889 = vmatpush.msra.mxu0 0.0
    %890 = vmatpush.msra.mxu0 0.0
    %891 = vmatpush.msra.mxu0 0.0
    %892 = vmatpush.msra.mxu0 0.0
    %893 = vmatpush.msra.mxu0 0.0
    %v894 = vand.u32 %v753, 4294901760
    %895 = vmatpush.msra.mxu0 %v894
    %v896 = vand.u32 %v749, 4294901760
    %897 = vmatmul.f32.gmra.mxu0 %v896
    %v898 = vpop.f32.mrf.mxu0
    %v899 = vadd.f32 %v877, %v898
    %900 = vdwg.mxu0
    %v901 = vsub.f32 %v22, %v23
    %v902 = vmul.f32 %v901, %v899
    %v903 = vadd.f32 %v23, %v902
    %904 = vst [vmem:[#allocation3] sm:$0xff] %v903
    // Predicated region
    $region22: #{tpu_custom_call.1} parent=1 // pred_check
      _
    $region23: #{tpu_custom_call.1} parent=1 // pred_check_branch
      %906 = sbr.rel (0) target = $region25
    $region24: #{tpu_custom_call.1} parent=1 // pred_region
      %908 = vsyncadd [#allocation4], 0
      %s910 = sshll.u32 [#allocation3], 4
      %s911 = int_to_ptr.vmem [resolvable:$true] %s910
      %s912 = sshll.u32 %s5, 4
      %s913 = int_to_ptr.hbm [resolvable:$true] %s912
      %915 = dma.vmem_to_hbm [thread:$0]  %s911, 128, %s913, [#allocation4]
    $region25: #{tpu_custom_call.1} parent=1 // pred_fallthru
      _
    // Predicated region
    $region26: #{tpu_custom_call.1} parent=1 // pred_check
      _
    $region27: #{tpu_custom_call.1} parent=1 // pred_check_branch
      %917 = sbr.rel (0) target = $region29
    $region28: #{tpu_custom_call.1} parent=1 // pred_region
      %919 = dma.done [#allocation4], 128
    $region29: #{tpu_custom_call.1} parent=1 // pred_fallthru
      _
    %920 = vsyncpa [#allocation4], 1

</llo_original>
